<compile_context>
chip_gen: v7x
topology: tpu7x:2x2x1
jax: 0.10.0
libtpu: 0.0.40
codegen_flags: <defaults>
</compile_context>

<pallas_src>
import functools
from math import sqrt

import jax
import jax.numpy as jnp
from jax.experimental import pallas as pl
from jax.experimental.pallas import tpu as pltpu


def residual_block_kernel(x_ref, w1_ref, b1_ref, w2_ref, b2_ref, o_ref):
    # x_ref: (TB, H) f32 activation tile (pipelined over the batch grid)
    # w*_ref: (H, H) bf16, pre-transposed to (in, out) so the dot is plain x @ W
    # b*_ref: (1, H) f32
    x = x_ref[...]
    h = jnp.dot(x.astype(jnp.bfloat16), w1_ref[...],
                preferred_element_type=jnp.float32)
    h = jnp.maximum(h + b1_ref[...], 0.0)                 # bias + ReLU in f32
    y = jnp.dot(h.astype(jnp.bfloat16), w2_ref[...],
                preferred_element_type=jnp.float32)
    o_ref[...] = jnp.maximum(y + b2_ref[...] + x, 0.0)    # residual add + ReLU


def prepare_params(w1, b1, w2, b2):
    """One-time parameter preparation (outside the per-call hot path).

    PyTorch nn.Linear stores weight as (out_features, in_features) and computes
    y = x @ W^T + b.  We transpose once here to (in, out) and cast to bf16 for
    the MXU; biases stay f32 and are reshaped to (1, H) for broadcasting.
    """
    H = b1.shape[0]
    return (
        jnp.asarray(w1.T, dtype=jnp.bfloat16),
        jnp.asarray(b1, dtype=jnp.float32).reshape(1, H),
        jnp.asarray(w2.T, dtype=jnp.bfloat16),
        jnp.asarray(b2, dtype=jnp.float32).reshape(1, H),
    )


@functools.partial(jax.jit, static_argnames=("block_b",))
def residual_block(x, w1_t, b1, w2_t, b2, *, block_b=128):
    """x: (B, H) f32; w*_t: (H, H) bf16 (in, out); b*: (1, H) f32."""
    B, H = x.shape

    # Batch tile: <= block_b rows, multiple of 8 (sublane granularity).
    TB = max(8, ((min(block_b, B) + 7) // 8) * 8)
    Bp = pl.cdiv(B, TB) * TB
    x_p = jnp.pad(x, ((0, Bp - B), (0, 0))) if Bp != B else x
    grid = (Bp // TB,)

    cost = pl.CostEstimate(
        flops=4 * Bp * H * H,                       # two (Bp,H)@(H,H) matmuls
        transcendentals=0,
        bytes_accessed=(2 * Bp * H * 4              # x in + out (f32)
                        + 2 * H * H * 2             # two bf16 weights
                        + 2 * H * 4),               # biases
    )

    # Resident weights + biases + double-buffered f32 x/out tiles, with headroom.
    vmem_needed = 2 * H * H * 2 + 2 * H * 4 + 2 * 2 * TB * H * 4
    vmem_limit = int(min(max(2 * vmem_needed, 32 * 1024 * 1024),
                         48 * 1024 * 1024))          # <= 48 MiB: safe on v7x

    out = pl.pallas_call(
        residual_block_kernel,
        out_shape=jax.ShapeDtypeStruct((Bp, H), jnp.float32),
        grid=grid,
        in_specs=[
            pl.BlockSpec((TB, H), lambda i: (i, 0)),   # x: pipelined batch tiles
            pl.BlockSpec((H, H), lambda i: (0, 0)),    # w1: resident in VMEM
            pl.BlockSpec((1, H), lambda i: (0, 0)),    # b1: resident
            pl.BlockSpec((H, H), lambda i: (0, 0)),    # w2: resident
            pl.BlockSpec((1, H), lambda i: (0, 0)),    # b2: resident
        ],
        out_specs=pl.BlockSpec((TB, H), lambda i: (i, 0)),
        compiler_params=pltpu.CompilerParams(
            dimension_semantics=("parallel",),
            vmem_limit_bytes=vmem_limit,
        ),
        cost_estimate=cost,
    )(x_p, w1_t, b1, w2_t, b2)

    return out[:B] if Bp != B else out


def _init_linear(key, out_features, in_features):
    # Deterministic init mimicking PyTorch default: U(-1/sqrt(fan_in), +1/sqrt(fan_in))
    kw, kb = jax.random.split(key)
    bound = 1.0 / sqrt(in_features)
    w = jax.random.uniform(kw, (out_features, in_features), jnp.float32, -bound, bound)
    b = jax.random.uniform(kb, (out_features,), jnp.float32, -bound, bound)
    return w, b


if __name__ == "__main__":
    key = jax.random.PRNGKey(0)
    k_x, k_l1, k_l2 = jax.random.split(key, 3)

    # Small demo shape; B=200 is deliberately not a multiple of the 128-row batch
    # tile so the padding + multi-step grid path is exercised (grid=(2,)).
    B, H = 200, 128
    x = jax.random.normal(k_x, (B, H), jnp.float32)
    w1, b1 = _init_linear(k_l1, H, H)
    w2, b2 = _init_linear(k_l2, H, H)

    params = prepare_params(w1, b1, w2, b2)   # one-time transpose + bf16 cast
    out = residual_block(x, *params)
    out = jax.block_until_ready(out)

    # Pure-JAX f32 reference. The kernel feeds bf16 operands to the MXU with f32
    # accumulation, so allow ~1e-2-level error vs the full-f32 reference.
    ref = jnp.maximum((jnp.maximum(x @ w1.T + b1, 0.0) @ w2.T + b2) + x, 0.0)
    assert out.shape == ref.shape
    max_diff = jnp.max(jnp.abs(out - ref))
    assert jnp.allclose(out, ref, atol=3e-2, rtol=3e-2), (
        f"mismatch vs reference: max abs diff {max_diff}")

    print("KERNEL_OK")
</pallas_src>

<mosaic_0001>
module attributes {stable_mosaic.version = 11 : i64} {
  func.func @residual_block_kernel(%arg0: i32, %arg1: memref<128x128xf32, #tpu.memory_space<vmem>>, %arg2: memref<128x128xbf16, #tpu.memory_space<vmem>>, %arg3: memref<1x128xf32, #tpu.memory_space<vmem>>, %arg4: memref<128x128xbf16, #tpu.memory_space<vmem>>, %arg5: memref<1x128xf32, #tpu.memory_space<vmem>>, %arg6: memref<128x128xf32, #tpu.memory_space<vmem>>) attributes {dimension_semantics = [#tpu.dimension_semantics<parallel>], iteration_bounds = array<i64: 2>, scalar_prefetch = 0 : i64, scratch_operands = 0 : i64, tpu.core_type = #tpu.core_type<tc>, window_params = [{transform_indices = @transform_0, window_bounds = array<i64: 128, 128>}, {pipeline_mode = #tpu.pipeline_mode<synchronous>, transform_indices = @transform_1, window_bounds = array<i64: 128, 128>}, {pipeline_mode = #tpu.pipeline_mode<synchronous>, transform_indices = @transform_2, window_bounds = array<i64: 1, 128>}, {pipeline_mode = #tpu.pipeline_mode<synchronous>, transform_indices = @transform_3, window_bounds = array<i64: 128, 128>}, {pipeline_mode = #tpu.pipeline_mode<synchronous>, transform_indices = @transform_4, window_bounds = array<i64: 1, 128>}, {transform_indices = @transform_5, window_bounds = array<i64: 128, 128>}]} {
    %c0 = arith.constant 0 : index
    %c0_0 = arith.constant 0 : index
    %0 = vector.load %arg1[%c0, %c0_0] : memref<128x128xf32, #tpu.memory_space<vmem>>, vector<128x128xf32>
    %1 = arith.truncf %0 : vector<128x128xf32> to vector<128x128xbf16>
    %c0_1 = arith.constant 0 : index
    %c0_2 = arith.constant 0 : index
    %2 = vector.load %arg2[%c0_1, %c0_2] : memref<128x128xbf16, #tpu.memory_space<vmem>>, vector<128x128xbf16>
    %cst = arith.constant dense<0.000000e+00> : vector<128x128xf32>
    %3 = tpu.matmul %1, %2, %cst {dimension_numbers = #tpu.dot_dimension_numbers<[1], [0], [0], [1], [0, 0, 1, 1], [], []>} : vector<128x128xbf16>, vector<128x128xbf16>, vector<128x128xf32> -> vector<128x128xf32>
    %c0_3 = arith.constant 0 : index
    %c0_4 = arith.constant 0 : index
    %4 = vector.load %arg3[%c0_3, %c0_4] : memref<1x128xf32, #tpu.memory_space<vmem>>, vector<1x128xf32>
    %5 = vector.broadcast %4 : vector<1x128xf32> to vector<128x128xf32>
    %6 = arith.addf %3, %5 : vector<128x128xf32>
    %cst_5 = arith.constant 0.000000e+00 : f32
    %7 = vector.broadcast %cst_5 : f32 to vector<128x128xf32>
    %8 = arith.maximumf %6, %7 : vector<128x128xf32>
    %9 = arith.truncf %8 : vector<128x128xf32> to vector<128x128xbf16>
    %c0_6 = arith.constant 0 : index
    %c0_7 = arith.constant 0 : index
    %10 = vector.load %arg4[%c0_6, %c0_7] : memref<128x128xbf16, #tpu.memory_space<vmem>>, vector<128x128xbf16>
    %cst_8 = arith.constant dense<0.000000e+00> : vector<128x128xf32>
    %11 = tpu.matmul %9, %10, %cst_8 {dimension_numbers = #tpu.dot_dimension_numbers<[1], [0], [0], [1], [0, 0, 1, 1], [], []>} : vector<128x128xbf16>, vector<128x128xbf16>, vector<128x128xf32> -> vector<128x128xf32>
    %c0_9 = arith.constant 0 : index
    %c0_10 = arith.constant 0 : index
    %12 = vector.load %arg5[%c0_9, %c0_10] : memref<1x128xf32, #tpu.memory_space<vmem>>, vector<1x128xf32>
    %13 = vector.broadcast %12 : vector<1x128xf32> to vector<128x128xf32>
    %14 = arith.addf %11, %13 : vector<128x128xf32>
    %15 = arith.addf %14, %0 : vector<128x128xf32>
    %cst_11 = arith.constant 0.000000e+00 : f32
    %16 = vector.broadcast %cst_11 : f32 to vector<128x128xf32>
    %17 = arith.maximumf %15, %16 : vector<128x128xf32>
    %c0_12 = arith.constant 0 : index
    %c0_13 = arith.constant 0 : index
    %18 = vector.load %arg6[%c0_12, %c0_13] : memref<128x128xf32, #tpu.memory_space<vmem>>, vector<128x128xf32>
    tpu.vector_store %arg6[%c0_12, %c0_13], %17 {strides = array<i32>} : memref<128x128xf32, #tpu.memory_space<vmem>>, vector<128x128xf32>,
    return
  }
  func.func @transform_0(%arg0: i32) -> (i32, i32) {
    %c0_i32 = arith.constant 0 : i32
    %c0_i32_0 = arith.constant 0 : i32
    return %arg0, %c0_i32 : i32, i32
  }
  func.func @transform_1(%arg0: i32) -> (i32, i32) {
    %c0_i32 = arith.constant 0 : i32
    %c0_i32_0 = arith.constant 0 : i32
    %c0_i32_1 = arith.constant 0 : i32
    return %c0_i32, %c0_i32_0 : i32, i32
  }
  func.func @transform_2(%arg0: i32) -> (i32, i32) {
    %c0_i32 = arith.constant 0 : i32
    %c0_i32_0 = arith.constant 0 : i32
    %c0_i32_1 = arith.constant 0 : i32
    return %c0_i32, %c0_i32_0 : i32, i32
  }
  func.func @transform_3(%arg0: i32) -> (i32, i32) {
    %c0_i32 = arith.constant 0 : i32
    %c0_i32_0 = arith.constant 0 : i32
    %c0_i32_1 = arith.constant 0 : i32
    return %c0_i32, %c0_i32_0 : i32, i32
  }
  func.func @transform_4(%arg0: i32) -> (i32, i32) {
    %c0_i32 = arith.constant 0 : i32
    %c0_i32_0 = arith.constant 0 : i32
    %c0_i32_1 = arith.constant 0 : i32
    return %c0_i32, %c0_i32_0 : i32, i32
  }
  func.func @transform_5(%arg0: i32) -> (i32, i32) {
    %c0_i32 = arith.constant 0 : i32
    %c0_i32_0 = arith.constant 0 : i32
    return %arg0, %c0_i32 : i32, i32
  }
}

</mosaic_0001>

<llo_original>
// kernel: residual_block.1
$region0: #{residual_block.1}
  #allocation0 [shape = 'u32[]', space=smem, size = 0x4, offset = 0x4, fixed_abs, tag = 'smem constant byte address 0x4 - core index']
  #allocation1 [shape = 'u32[144,128]{1,0:T(1,128)}', space=vmem, size = 0x12000, scoped, tag = 'internal scratch']
  %s0 = inlined_call_operand.vmem [shape: f32[256,128], index: 0, kind: input, shape index: {}]
  %s1 = inlined_call_operand.vmem [shape: bf16[128,128], index: 1, kind: input, shape index: {}]
  %s2 = inlined_call_operand.vmem [shape: f32[1,128], index: 2, kind: input, shape index: {}]
  %s3 = inlined_call_operand.vmem [shape: bf16[128,128], index: 3, kind: input, shape index: {}]
  %s4 = inlined_call_operand.vmem [shape: f32[1,128], index: 4, kind: input, shape index: {}]
  %s5 = inlined_call_operand.vmem [shape: f32[256,128], index: 5, kind: output, shape index: {}]
  %s6 = sld [smem:[#allocation0]]
  $region53: #{residual_block.1} parent=0
    _
  %s8 = ssub.s32 1, %s6
  %s9 = scalar_select 0, %s8, %s6
  loop: start=0, step=1, limit=4
  $region2: #{residual_block.1} parent=0 // loop_pre_header
    _
  $region3: #{residual_block.1} parent=0 // loop_header
    %s11 = sphi 0, %s15
    %p12 = scmp.ge.s32.totalorder %s11, 4
    %s21 = sphi 0, %s23
    %s24 = sphi 0, %s21
    %s25 = sphi 0, %s24
    %s41 = sphi 0, %s25
    %s45 = sphi 0, %s45
    %s47 = sphi 0, %s45
    %s48 = sphi 0, %s47
    %s62 = sphi 0, %s48
    %s66 = sphi 0, %s66
    %s68 = sphi 0, %s66
    %s69 = sphi 0, %s68
    %s83 = sphi 0, %s69
    %s87 = sphi 0, %s87
    %s89 = sphi 0, %s87
    %s90 = sphi 0, %s89
    %s104 = sphi 0, %s90
    %s108 = sphi 0, %s108
    %s110 = sphi 0, %s108
    %s111 = sphi 0, %s110
    %s125 = sphi 0, %s111
    %s131 = sphi 0, %s133
    %s134 = sphi 0, %s131
    %s135 = sphi 0, %s134
    %s151 = sphi 0, %s135
  $region4: #{residual_block.1} parent=0 // loop_header_branch
    %14 = sbr.rel (%p12) target = $region8
  $region5: #{residual_block.1} parent=0 // loop_body
    %s16 = ssub.s32 %s11, 1
    %s17 = ssub.s32 %s11, 2
    %s18 = sadd.s32 %s11, 1
    %s19 = ssub.s32 %s11, %s18
    %p20 = scmp.eq.s32.totalorder %s19, 0
    %s22 = sadd.s32 %s21, 1
    %s23 = scalar_select %p20, %s21, %s22
    %p26 = pneg %p20
    %p27 = scmp.eq.s32.totalorder %s11, 1
    %p28 = por %p26, %p27
    %p29 = scmp.ne.s32.totalorder %s21, %s24
    %p30 = scmp.eq.s32.totalorder %s11, 0
    %p31 = por %p29, %p30
    %p32 = scmp.ne.s32.totalorder %s21, %s24
    %p33 = scmp.eq.s32.totalorder %s16, 1
    %p34 = por %p32, %p33
    %p35 = scmp.ne.s32.totalorder %s24, %s25
    %p36 = scmp.eq.s32.totalorder %s16, 0
    %p37 = por %p35, %p36
    %p38 = scmp.ne.s32.totalorder %s24, %s25
    %p39 = scmp.eq.s32.totalorder %s17, 1
    %p40 = por %p38, %p39
    %p42 = scmp.ne.s32.totalorder %s25, %s41
    %p43 = scmp.eq.s32.totalorder %s17, 0
    %p44 = por %p42, %p43
    %s46 = sadd.s32 %s45, 1
    %p49 = scmp.eq.s32.totalorder %s11, 1
    %p50 = scmp.ne.s32.totalorder %s45, %s47
    %p51 = scmp.eq.s32.totalorder %s11, 0
    %p52 = por %p50, %p51
    %p53 = scmp.ne.s32.totalorder %s45, %s47
    %p54 = scmp.eq.s32.totalorder %s16, 1
    %p55 = por %p53, %p54
    %p56 = scmp.ne.s32.totalorder %s47, %s48
    %p57 = scmp.eq.s32.totalorder %s16, 0
    %p58 = por %p56, %p57
    %p59 = scmp.ne.s32.totalorder %s47, %s48
    %p60 = scmp.eq.s32.totalorder %s17, 1
    %p61 = por %p59, %p60
    %p63 = scmp.ne.s32.totalorder %s48, %s62
    %p64 = scmp.eq.s32.totalorder %s17, 0
    %p65 = por %p63, %p64
    %s67 = sadd.s32 %s66, 1
    %p70 = scmp.eq.s32.totalorder %s11, 1
    %p71 = scmp.ne.s32.totalorder %s66, %s68
    %p72 = scmp.eq.s32.totalorder %s11, 0
    %p73 = por %p71, %p72
    %p74 = scmp.ne.s32.totalorder %s66, %s68
    %p75 = scmp.eq.s32.totalorder %s16, 1
    %p76 = por %p74, %p75
    %p77 = scmp.ne.s32.totalorder %s68, %s69
    %p78 = scmp.eq.s32.totalorder %s16, 0
    %p79 = por %p77, %p78
    %p80 = scmp.ne.s32.totalorder %s68, %s69
    %p81 = scmp.eq.s32.totalorder %s17, 1
    %p82 = por %p80, %p81
    %p84 = scmp.ne.s32.totalorder %s69, %s83
    %p85 = scmp.eq.s32.totalorder %s17, 0
    %p86 = por %p84, %p85
    %s88 = sadd.s32 %s87, 1
    %p91 = scmp.eq.s32.totalorder %s11, 1
    %p92 = scmp.ne.s32.totalorder %s87, %s89
    %p93 = scmp.eq.s32.totalorder %s11, 0
    %p94 = por %p92, %p93
    %p95 = scmp.ne.s32.totalorder %s87, %s89
    %p96 = scmp.eq.s32.totalorder %s16, 1
    %p97 = por %p95, %p96
    %p98 = scmp.ne.s32.totalorder %s89, %s90
    %p99 = scmp.eq.s32.totalorder %s16, 0
    %p100 = por %p98, %p99
    %p101 = scmp.ne.s32.totalorder %s89, %s90
    %p102 = scmp.eq.s32.totalorder %s17, 1
    %p103 = por %p101, %p102
    %p105 = scmp.ne.s32.totalorder %s90, %s104
    %p106 = scmp.eq.s32.totalorder %s17, 0
    %p107 = por %p105, %p106
    %s109 = sadd.s32 %s108, 1
    %p112 = scmp.eq.s32.totalorder %s11, 1
    %p113 = scmp.ne.s32.totalorder %s108, %s110
    %p114 = scmp.eq.s32.totalorder %s11, 0
    %p115 = por %p113, %p114
    %p116 = scmp.ne.s32.totalorder %s108, %s110
    %p117 = scmp.eq.s32.totalorder %s16, 1
    %p118 = por %p116, %p117
    %p119 = scmp.ne.s32.totalorder %s110, %s111
    %p120 = scmp.eq.s32.totalorder %s16, 0
    %p121 = por %p119, %p120
    %p122 = scmp.ne.s32.totalorder %s110, %s111
    %p123 = scmp.eq.s32.totalorder %s17, 1
    %p124 = por %p122, %p123
    %p126 = scmp.ne.s32.totalorder %s111, %s125
    %p127 = scmp.eq.s32.totalorder %s17, 0
    %p128 = por %p126, %p127
    %s129 = ssub.s32 %s11, %s18
    %p130 = scmp.eq.s32.totalorder %s129, 0
    %s132 = sadd.s32 %s131, 1
    %s133 = scalar_select %p130, %s131, %s132
    %p136 = pneg %p130
    %p137 = scmp.eq.s32.totalorder %s11, 1
    %p138 = por %p136, %p137
    %p139 = scmp.ne.s32.totalorder %s131, %s134
    %p140 = scmp.eq.s32.totalorder %s11, 0
    %p141 = por %p139, %p140
    %p142 = scmp.ne.s32.totalorder %s131, %s134
    %p143 = scmp.eq.s32.totalorder %s16, 1
    %p144 = por %p142, %p143
    %p145 = scmp.ne.s32.totalorder %s134, %s135
    %p146 = scmp.eq.s32.totalorder %s16, 0
    %p147 = por %p145, %p146
    %p148 = scmp.ne.s32.totalorder %s134, %s135
    %p149 = scmp.eq.s32.totalorder %s17, 1
    %p150 = por %p148, %p149
    %p152 = scmp.ne.s32.totalorder %s135, %s151
    %p153 = scmp.eq.s32.totalorder %s17, 0
    %p154 = por %p152, %p153
    %p155 = scmp.le.s32.totalorder 1, %s11
    %p156 = scmp.lt.s32.totalorder %s11, 3
    %p157 = pnand %p155, %p156
    %p158 = pneg %p157
    // Predicated region
    $region9: #{residual_block.1} parent=5 // pred_check
      _
    $region10: #{residual_block.1} parent=5 // pred_check_branch
      %160 = sbr.rel (%p157) target = $region12
    $region11: #{residual_block.1} parent=5 // pred_region
      %s161 = ssub.s32 %s11, 1
      // Predicated region
      $region13: #{residual_block.1} parent=11 // pred_check
        %p162 = pneg %p58
      $region14: #{residual_block.1} parent=11 // pred_check_branch
        %164 = sbr.rel (%p162) target = $region16
      $region15: #{residual_block.1} parent=11 // pred_region
        _
      $region16: #{residual_block.1} parent=11 // pred_fallthru
        _
      // Predicated region
      $region17: #{residual_block.1} parent=11 // pred_check
        %p165 = pneg %p79
      $region18: #{residual_block.1} parent=11 // pred_check_branch
        %167 = sbr.rel (%p165) target = $region20
      $region19: #{residual_block.1} parent=11 // pred_region
        _
      $region20: #{residual_block.1} parent=11 // pred_fallthru
        _
      // Predicated region
      $region21: #{residual_block.1} parent=11 // pred_check
        %p168 = pneg %p100
      $region22: #{residual_block.1} parent=11 // pred_check_branch
        %170 = sbr.rel (%p168) target = $region24
      $region23: #{residual_block.1} parent=11 // pred_region
        _
      $region24: #{residual_block.1} parent=11 // pred_fallthru
        _
      // Predicated region
      $region25: #{residual_block.1} parent=11 // pred_check
        %p171 = pneg %p121
      $region26: #{residual_block.1} parent=11 // pred_check_branch
        %173 = sbr.rel (%p171) target = $region28
      $region27: #{residual_block.1} parent=11 // pred_region
        _
      $region28: #{residual_block.1} parent=11 // pred_fallthru
        _
    $region12: #{residual_block.1} parent=5 // pred_fallthru
      _
    %p174 = scmp.lt.s32.totalorder %s11, 2
    // Predicated region
    $region29: #{residual_block.1} parent=5 // pred_check
      %p175 = pneg %p174
    $region30: #{residual_block.1} parent=5 // pred_check_branch
      %177 = sbr.rel (%p175) target = $region32
    $region31: #{residual_block.1} parent=5 // pred_region
      // Predicated region
      $region33: #{residual_block.1} parent=31 // pred_check
        %p178 = pneg %p31
      $region34: #{residual_block.1} parent=31 // pred_check_branch
        %180 = sbr.rel (%p178) target = $region36
      $region35: #{residual_block.1} parent=31 // pred_region
        %s181 = smul.u32 16, %s11
        %p182 = scmp.lt.s32.totalorder %s181, 31
        %s183 = scalar_select %p182, %s181, 31
        %s184 = smul.addr %s183, 8
        %s185 = scalar_lea.vmem %s0, %s184
        %s186 = smul.u32 16, %s11
      $region36: #{residual_block.1} parent=31 // pred_fallthru
        _
    $region32: #{residual_block.1} parent=5 // pred_fallthru
      _
    %p187 = scmp.le.s32.totalorder 1, %s11
    %p188 = scmp.lt.s32.totalorder %s11, 3
    %p189 = pnand %p187, %p188
    %p190 = pneg %p189
    // Predicated region
    $region37: #{residual_block.1} parent=5 // pred_check
      _
    $region38: #{residual_block.1} parent=5 // pred_check_branch
      %192 = sbr.rel (%p189) target = $region40
    $region39: #{residual_block.1} parent=5 // pred_region
      %s193 = ssub.s32 %s11, 1
      %s194 = smul.u32 16, %s16
      %p195 = scmp.lt.s32.totalorder %s194, 31
      %s196 = scalar_select %p195, %s194, 31
      %s197 = smul.addr %s196, 8
      %s198 = scalar_lea.vmem %s0, %s197
      %p199 = pneg %p37
      %p200 = pneg %p34
      %p201 = pneg %p58
      %p202 = pneg %p55
      %p203 = pneg %p79
      %p204 = pneg %p76
      %p205 = pneg %p100
      %p206 = pneg %p97
      %p207 = pneg %p121
      %p208 = pneg %p118
      %p209 = pneg %p147
      %p210 = pneg %p144
      %s211 = smul.u32 16, %s16
      %p212 = scmp.lt.s32.totalorder %s211, 31
      %s213 = scalar_select %p212, %s211, 31
      %s214 = smul.addr %s213, 8
      %s215 = scalar_lea.vmem %s5, %s214
      %s216 = smul.u32 16, %s16
      %p217 = scmp.lt.s32.totalorder %s216, 31
      %s218 = scalar_select %p217, %s216, 31
      %s219 = smul.addr %s218, 8
      %s220 = scalar_lea.vmem %s0, %s219
      %s221 = smul.u32 16, %s16
      %s222 = smul.u32 16, %s16
      %p223 = scmp.lt.s32.totalorder %s222, 31
      %s224 = scalar_select %p223, %s222, 31
      %s225 = smul.addr %s224, 8
      %s226 = scalar_lea.vmem %s5, %s225
      %s227 = smul.u32 16, %s16
      %v229 = vld [vmem:[%s220] sm:$0xff]
      %v230 = vld [vmem:[%s220 + $0x8] sm:$0xff]
      %v231 = vld [vmem:[%s220 + $0x10] sm:$0xff]
      %v232 = vld [vmem:[%s220 + $0x18] sm:$0xff]
      %v233 = vld [vmem:[%s220 + $0x20] sm:$0xff]
      %v234 = vld [vmem:[%s220 + $0x28] sm:$0xff]
      %v235 = vld [vmem:[%s220 + $0x30] sm:$0xff]
      %v236 = vld [vmem:[%s220 + $0x38] sm:$0xff]
      %v237 = vld [vmem:[%s220 + $0x40] sm:$0xff]
      %v238 = vld [vmem:[%s220 + $0x48] sm:$0xff]
      %v239 = vld [vmem:[%s220 + $0x50] sm:$0xff]
      %v240 = vld [vmem:[%s220 + $0x58] sm:$0xff]
      %v241 = vld [vmem:[%s220 + $0x60] sm:$0xff]
      %v242 = vld [vmem:[%s220 + $0x68] sm:$0xff]
      %v243 = vld [vmem:[%s220 + $0x70] sm:$0xff]
      %v244 = vld [vmem:[%s220 + $0x78] sm:$0xff]
      %v245 = vpack.c.bf16 %v230, %v229
      %v246 = vpack.c.bf16 %v232, %v231
      %v247 = vpack.c.bf16 %v234, %v233
      %v248 = vpack.c.bf16 %v236, %v235
      %v249 = vpack.c.bf16 %v238, %v237
      %v250 = vpack.c.bf16 %v240, %v239
      %v251 = vpack.c.bf16 %v242, %v241
      %v252 = vpack.c.bf16 %v244, %v243
      %v253 = vld [vmem:[%s1] sm:$0xf]
      %v254 = vld [vmem:[%s1 + $0x4] sm:$0xf]
      %v255 = vld [vmem:[%s1 + $0x8] sm:$0xf]
      %v256 = vld [vmem:[%s1 + $0xc] sm:$0xf]
      %v257 = vld [vmem:[%s1 + $0x10] sm:$0xf]
      %v258 = vld [vmem:[%s1 + $0x14] sm:$0xf]
      %v259 = vld [vmem:[%s1 + $0x18] sm:$0xf]
      %v260 = vld [vmem:[%s1 + $0x1c] sm:$0xf]
      %v261 = vld [vmem:[%s1 + $0x20] sm:$0xf]
      %v262 = vld [vmem:[%s1 + $0x24] sm:$0xf]
      %v263 = vld [vmem:[%s1 + $0x28] sm:$0xf]
      %v264 = vld [vmem:[%s1 + $0x2c] sm:$0xf]
      %v265 = vld [vmem:[%s1 + $0x30] sm:$0xf]
      %v266 = vld [vmem:[%s1 + $0x34] sm:$0xf]
      %v267 = vld [vmem:[%s1 + $0x38] sm:$0xf]
      %v268 = vld [vmem:[%s1 + $0x3c] sm:$0xf]
      %v269 = vld [vmem:[%s2] sm:$0x1]
      %v271 = vlaneseq
      %v272 = vshrl.u32 %v271, 7
      %v273 = vsub.s32 0, %v272
      %v274 = vrot.slane %v269, %v273
      %v292 = vunpack.c.l.b16 %v253
      %v293 = vunpack.c.l.b16 %v254
      %v294 = vunpack.c.l.b16 %v255
      %v295 = vunpack.c.l.b16 %v256
      %v296 = vunpack.c.l.b16 %v257
      %v297 = vunpack.c.l.b16 %v258
      %v298 = vunpack.c.l.b16 %v259
      %v299 = vunpack.c.l.b16 %v260
      %v300 = vunpack.c.l.b16 %v261
      %v301 = vunpack.c.l.b16 %v262
      %v302 = vunpack.c.l.b16 %v263
      %v303 = vunpack.c.l.b16 %v264
      %v304 = vunpack.c.l.b16 %v265
      %v305 = vunpack.c.l.b16 %v266
      %v306 = vunpack.c.l.b16 %v267
      %v307 = vunpack.c.l.b16 %v268
      %v308 = vpack.c.b16 %v293, %v292
      %v309 = vpack.c.b16 %v295, %v294
      %v310 = vpack.c.b16 %v297, %v296
      %v311 = vpack.c.b16 %v299, %v298
      %v312 = vpack.c.b16 %v301, %v300
      %v313 = vpack.c.b16 %v303, %v302
      %v314 = vpack.c.b16 %v305, %v304
      %v315 = vpack.c.b16 %v307, %v306
      %324 = vmatprep.subr.bf16.mxu0 0
      %325 = vmatpush1.bf16.msra.mxu0 %v308
      %326 = vmatprep.subr.bf16.mxu0 0
      %327 = vmatpush1.bf16.msra.mxu0 %v309
      %328 = vmatprep.subr.bf16.mxu0 0
      %329 = vmatpush1.bf16.msra.mxu0 %v310
      %330 = vmatprep.subr.bf16.mxu0 0
      %331 = vmatpush1.bf16.msra.mxu0 %v311
      %332 = vmatprep.subr.bf16.mxu0 0
      %333 = vmatpush1.bf16.msra.mxu0 %v312
      %334 = vmatprep.subr.bf16.mxu0 0
      %335 = vmatpush1.bf16.msra.mxu0 %v313
      %336 = vmatprep.subr.bf16.mxu0 0
      %337 = vmatpush1.bf16.msra.mxu0 %v314
      %338 = vmatprep.subr.bf16.mxu0 0
      %339 = vmatpush1.bf16.msra.mxu0 %v315
      %340 = vmatprep.subr.bf16.mxu0 0
      %341 = vmatpush1.bf16.msra.mxu0 0
      %342 = vmatprep.subr.bf16.mxu0 0
      %343 = vmatpush1.bf16.msra.mxu0 0
      %344 = vmatprep.subr.bf16.mxu0 0
      %345 = vmatpush1.bf16.msra.mxu0 0
      %346 = vmatprep.subr.bf16.mxu0 0
      %347 = vmatpush1.bf16.msra.mxu0 0
      %348 = vmatprep.subr.bf16.mxu0 0
      %349 = vmatpush1.bf16.msra.mxu0 0
      %350 = vmatprep.subr.bf16.mxu0 0
      %351 = vmatpush1.bf16.msra.mxu0 0
      %352 = vmatprep.subr.bf16.mxu0 0
      %353 = vmatpush1.bf16.msra.mxu0 0
      %354 = vmatprep.subr.bf16.mxu0 0
      %355 = vmatpush1.bf16.msra.mxu0 0
      %356 = vmatprep.mubr.bf16.mxu0 0
      %357 = vmatmul.mubr.bf16.gmra.mrb[0].mxu0 %v245
      %v358 = vpop.f32.mrb[0].mxu0
      %v359 = vadd.f32 %v274, %v358
      %v360 = vpop.f32.mrb[0].mxu0
      %v361 = vpop.f32.mrb[0].mxu0
      %v362 = vadd.f32 %v274, %v361
      %v363 = vpop.f32.mrb[0].mxu0
      %364 = vmatprep.mubr.bf16.mxu0 0
      %365 = vmatmul.mubr.bf16.gmra.mrb[0].mxu0 %v246
      %v366 = vpop.f32.mrb[0].mxu0
      %v367 = vadd.f32 %v274, %v366
      %v368 = vpop.f32.mrb[0].mxu0
      %v369 = vpop.f32.mrb[0].mxu0
      %v370 = vadd.f32 %v274, %v369
      %v371 = vpop.f32.mrb[0].mxu0
      %372 = vmatprep.mubr.bf16.mxu0 0
      %373 = vmatmul.mubr.bf16.gmra.mrb[0].mxu0 %v247
      %v374 = vpop.f32.mrb[0].mxu0
      %v375 = vadd.f32 %v274, %v374
      %v376 = vpop.f32.mrb[0].mxu0
      %v377 = vpop.f32.mrb[0].mxu0
      %v378 = vadd.f32 %v274, %v377
      %v379 = vpop.f32.mrb[0].mxu0
      %380 = vmatprep.mubr.bf16.mxu0 0
      %381 = vmatmul.mubr.bf16.gmra.mrb[0].mxu0 %v248
      %v382 = vpop.f32.mrb[0].mxu0
      %v383 = vadd.f32 %v274, %v382
      %v384 = vpop.f32.mrb[0].mxu0
      %v385 = vpop.f32.mrb[0].mxu0
      %v386 = vadd.f32 %v274, %v385
      %v387 = vpop.f32.mrb[0].mxu0
      %388 = vmatprep.mubr.bf16.mxu0 0
      %389 = vmatmul.mubr.bf16.gmra.mrb[0].mxu0 %v249
      %v390 = vpop.f32.mrb[0].mxu0
      %v391 = vadd.f32 %v274, %v390
      %v392 = vpop.f32.mrb[0].mxu0
      %v393 = vpop.f32.mrb[0].mxu0
      %v394 = vadd.f32 %v274, %v393
      %v395 = vpop.f32.mrb[0].mxu0
      %396 = vmatprep.mubr.bf16.mxu0 0
      %397 = vmatmul.mubr.bf16.gmra.mrb[0].mxu0 %v250
      %v398 = vpop.f32.mrb[0].mxu0
      %v399 = vadd.f32 %v274, %v398
      %v400 = vpop.f32.mrb[0].mxu0
      %v401 = vpop.f32.mrb[0].mxu0
      %v402 = vadd.f32 %v274, %v401
      %v403 = vpop.f32.mrb[0].mxu0
      %404 = vmatprep.mubr.bf16.mxu0 0
      %405 = vmatmul.mubr.bf16.gmra.mrb[0].mxu0 %v251
      %v406 = vpop.f32.mrb[0].mxu0
      %v407 = vadd.f32 %v274, %v406
      %v408 = vpop.f32.mrb[0].mxu0
      %v409 = vpop.f32.mrb[0].mxu0
      %v410 = vadd.f32 %v274, %v409
      %v411 = vpop.f32.mrb[0].mxu0
      %412 = vmatprep.mubr.bf16.mxu0 0
      %413 = vmatmul.mubr.bf16.gmra.mrb[0].mxu0 %v252
      %v414 = vpop.f32.mrb[0].mxu0
      %v415 = vadd.f32 %v274, %v414
      %v416 = vpop.f32.mrb[0].mxu0
      %v417 = vpop.f32.mrb[0].mxu0
      %v418 = vadd.f32 %v274, %v417
      %v419 = vpop.f32.mrb[0].mxu0
      %420 = vdwg.mxu0
      %v421 = vmax.f32 %v359, 0.0
      %v422 = vmax.f32 %v362, 0.0
      %v423 = vmax.f32 %v367, 0.0
      %v424 = vmax.f32 %v370, 0.0
      %v425 = vmax.f32 %v375, 0.0
      %v426 = vmax.f32 %v378, 0.0
      %v427 = vmax.f32 %v383, 0.0
      %v428 = vmax.f32 %v386, 0.0
      %v429 = vmax.f32 %v391, 0.0
      %v430 = vmax.f32 %v394, 0.0
      %v431 = vmax.f32 %v399, 0.0
      %v432 = vmax.f32 %v402, 0.0
      %v433 = vmax.f32 %v407, 0.0
      %v434 = vmax.f32 %v410, 0.0
      %v435 = vmax.f32 %v415, 0.0
      %v436 = vmax.f32 %v418, 0.0
      %v437 = vpack.c.bf16 %v422, %v421
      %v438 = vpack.c.bf16 %v424, %v423
      %v439 = vpack.c.bf16 %v426, %v425
      %v440 = vpack.c.bf16 %v428, %v427
      %v441 = vpack.c.bf16 %v430, %v429
      %v442 = vpack.c.bf16 %v432, %v431
      %v443 = vpack.c.bf16 %v434, %v433
      %v444 = vpack.c.bf16 %v436, %v435
      %v445 = vld [vmem:[%s3] sm:$0xf]
      %v446 = vld [vmem:[%s3 + $0x4] sm:$0xf]
      %v447 = vld [vmem:[%s3 + $0x8] sm:$0xf]
      %v448 = vld [vmem:[%s3 + $0xc] sm:$0xf]
      %v449 = vld [vmem:[%s3 + $0x10] sm:$0xf]
      %v450 = vld [vmem:[%s3 + $0x14] sm:$0xf]
      %v451 = vld [vmem:[%s3 + $0x18] sm:$0xf]
      %v452 = vld [vmem:[%s3 + $0x1c] sm:$0xf]
      %v453 = vld [vmem:[%s3 + $0x20] sm:$0xf]
      %v454 = vld [vmem:[%s3 + $0x24] sm:$0xf]
      %v455 = vld [vmem:[%s3 + $0x28] sm:$0xf]
      %v456 = vld [vmem:[%s3 + $0x2c] sm:$0xf]
      %v457 = vld [vmem:[%s3 + $0x30] sm:$0xf]
      %v458 = vld [vmem:[%s3 + $0x34] sm:$0xf]
      %v459 = vld [vmem:[%s3 + $0x38] sm:$0xf]
      %v460 = vld [vmem:[%s3 + $0x3c] sm:$0xf]
      %v461 = vld [vmem:[%s4] sm:$0x1]
      %v463 = vlaneseq
      %v464 = vshrl.u32 %v463, 7
      %v465 = vsub.s32 0, %v464
      %v466 = vrot.slane %v461, %v465
      %v484 = vunpack.c.l.b16 %v445
      %v485 = vunpack.c.l.b16 %v446
      %v486 = vunpack.c.l.b16 %v447
      %v487 = vunpack.c.l.b16 %v448
      %v488 = vunpack.c.l.b16 %v449
      %v489 = vunpack.c.l.b16 %v450
      %v490 = vunpack.c.l.b16 %v451
      %v491 = vunpack.c.l.b16 %v452
      %v492 = vunpack.c.l.b16 %v453
      %v493 = vunpack.c.l.b16 %v454
      %v494 = vunpack.c.l.b16 %v455
      %v495 = vunpack.c.l.b16 %v456
      %v496 = vunpack.c.l.b16 %v457
      %v497 = vunpack.c.l.b16 %v458
      %v498 = vunpack.c.l.b16 %v459
      %v499 = vunpack.c.l.b16 %v460
      %v500 = vpack.c.b16 %v485, %v484
      %v501 = vpack.c.b16 %v487, %v486
      %v502 = vpack.c.b16 %v489, %v488
      %v503 = vpack.c.b16 %v491, %v490
      %v504 = vpack.c.b16 %v493, %v492
      %v505 = vpack.c.b16 %v495, %v494
      %v506 = vpack.c.b16 %v497, %v496
      %v507 = vpack.c.b16 %v499, %v498
      %516 = vmatprep.subr.bf16.mxu0 0
      %517 = vmatpush1.bf16.msra.mxu0 %v500
      %518 = vmatprep.subr.bf16.mxu0 0
      %519 = vmatpush1.bf16.msra.mxu0 %v501
      %520 = vmatprep.subr.bf16.mxu0 0
      %521 = vmatpush1.bf16.msra.mxu0 %v502
      %522 = vmatprep.subr.bf16.mxu0 0
      %523 = vmatpush1.bf16.msra.mxu0 %v503
      %524 = vmatprep.subr.bf16.mxu0 0
      %525 = vmatpush1.bf16.msra.mxu0 %v504
      %526 = vmatprep.subr.bf16.mxu0 0
      %527 = vmatpush1.bf16.msra.mxu0 %v505
      %528 = vmatprep.subr.bf16.mxu0 0
      %529 = vmatpush1.bf16.msra.mxu0 %v506
      %530 = vmatprep.subr.bf16.mxu0 0
      %531 = vmatpush1.bf16.msra.mxu0 %v507
      %532 = vmatprep.subr.bf16.mxu0 0
      %533 = vmatpush1.bf16.msra.mxu0 0
      %534 = vmatprep.subr.bf16.mxu0 0
      %535 = vmatpush1.bf16.msra.mxu0 0
      %536 = vmatprep.subr.bf16.mxu0 0
      %537 = vmatpush1.bf16.msra.mxu0 0
      %538 = vmatprep.subr.bf16.mxu0 0
      %539 = vmatpush1.bf16.msra.mxu0 0
      %540 = vmatprep.subr.bf16.mxu0 0
      %541 = vmatpush1.bf16.msra.mxu0 0
      %542 = vmatprep.subr.bf16.mxu0 0
      %543 = vmatpush1.bf16.msra.mxu0 0
      %544 = vmatprep.subr.bf16.mxu0 0
      %545 = vmatpush1.bf16.msra.mxu0 0
      %546 = vmatprep.subr.bf16.mxu0 0
      %547 = vmatpush1.bf16.msra.mxu0 0
      %548 = vmatprep.mubr.bf16.mxu0 0
      %549 = vmatmul.mubr.bf16.gmra.mrb[0].mxu0 %v437
      %v550 = vpop.f32.mrb[0].mxu0
      %v551 = vadd.f32 %v466, %v550
      %v552 = vpop.f32.mrb[0].mxu0
      %v553 = vpop.f32.mrb[0].mxu0
      %v554 = vadd.f32 %v466, %v553
      %v555 = vpop.f32.mrb[0].mxu0
      %556 = vmatprep.mubr.bf16.mxu0 0
      %557 = vmatmul.mubr.bf16.gmra.mrb[0].mxu0 %v438
      %v558 = vpop.f32.mrb[0].mxu0
      %v559 = vadd.f32 %v466, %v558
      %v560 = vpop.f32.mrb[0].mxu0
      %v561 = vpop.f32.mrb[0].mxu0
      %v562 = vadd.f32 %v466, %v561
      %v563 = vpop.f32.mrb[0].mxu0
      %564 = vmatprep.mubr.bf16.mxu0 0
      %565 = vmatmul.mubr.bf16.gmra.mrb[0].mxu0 %v439
      %v566 = vpop.f32.mrb[0].mxu0
      %v567 = vadd.f32 %v466, %v566
      %v568 = vpop.f32.mrb[0].mxu0
      %v569 = vpop.f32.mrb[0].mxu0
      %v570 = vadd.f32 %v466, %v569
      %v571 = vpop.f32.mrb[0].mxu0
      %572 = vmatprep.mubr.bf16.mxu0 0
      %573 = vmatmul.mubr.bf16.gmra.mrb[0].mxu0 %v440
      %v574 = vpop.f32.mrb[0].mxu0
      %v575 = vadd.f32 %v466, %v574
      %v576 = vpop.f32.mrb[0].mxu0
      %v577 = vpop.f32.mrb[0].mxu0
      %v578 = vadd.f32 %v466, %v577
      %v579 = vpop.f32.mrb[0].mxu0
      %580 = vmatprep.mubr.bf16.mxu0 0
      %581 = vmatmul.mubr.bf16.gmra.mrb[0].mxu0 %v441
      %v582 = vpop.f32.mrb[0].mxu0
      %v583 = vadd.f32 %v466, %v582
      %v584 = vpop.f32.mrb[0].mxu0
      %v585 = vpop.f32.mrb[0].mxu0
      %v586 = vadd.f32 %v466, %v585
      %v587 = vpop.f32.mrb[0].mxu0
      %588 = vmatprep.mubr.bf16.mxu0 0
      %589 = vmatmul.mubr.bf16.gmra.mrb[0].mxu0 %v442
      %v590 = vpop.f32.mrb[0].mxu0
      %v591 = vadd.f32 %v466, %v590
      %v592 = vpop.f32.mrb[0].mxu0
      %v593 = vpop.f32.mrb[0].mxu0
      %v594 = vadd.f32 %v466, %v593
      %v595 = vpop.f32.mrb[0].mxu0
      %596 = vmatprep.mubr.bf16.mxu0 0
      %597 = vmatmul.mubr.bf16.gmra.mrb[0].mxu0 %v443
      %v598 = vpop.f32.mrb[0].mxu0
      %v599 = vadd.f32 %v466, %v598
      %v600 = vpop.f32.mrb[0].mxu0
      %v601 = vpop.f32.mrb[0].mxu0
      %v602 = vadd.f32 %v466, %v601
      %v603 = vpop.f32.mrb[0].mxu0
      %604 = vmatprep.mubr.bf16.mxu0 0
      %605 = vmatmul.mubr.bf16.gmra.mrb[0].mxu0 %v444
      %v606 = vpop.f32.mrb[0].mxu0
      %v607 = vadd.f32 %v466, %v606
      %v608 = vpop.f32.mrb[0].mxu0
      %v609 = vpop.f32.mrb[0].mxu0
      %v610 = vadd.f32 %v466, %v609
      %v611 = vpop.f32.mrb[0].mxu0
      %612 = vdwg.mxu0
      %v613 = vadd.f32 %v551, %v229
      %v614 = vadd.f32 %v554, %v230
      %v615 = vadd.f32 %v559, %v231
      %v616 = vadd.f32 %v562, %v232
      %v617 = vadd.f32 %v567, %v233
      %v618 = vadd.f32 %v570, %v234
      %v619 = vadd.f32 %v575, %v235
      %v620 = vadd.f32 %v578, %v236
      %v621 = vadd.f32 %v583, %v237
      %v622 = vadd.f32 %v586, %v238
      %v623 = vadd.f32 %v591, %v239
      %v624 = vadd.f32 %v594, %v240
      %v625 = vadd.f32 %v599, %v241
      %v626 = vadd.f32 %v602, %v242
      %v627 = vadd.f32 %v607, %v243
      %v628 = vadd.f32 %v610, %v244
      %v629 = vmax.f32 %v613, 0.0
      %v630 = vmax.f32 %v614, 0.0
      %v631 = vmax.f32 %v615, 0.0
      %v632 = vmax.f32 %v616, 0.0
      %v633 = vmax.f32 %v617, 0.0
      %v634 = vmax.f32 %v618, 0.0
      %v635 = vmax.f32 %v619, 0.0
      %v636 = vmax.f32 %v620, 0.0
      %v637 = vmax.f32 %v621, 0.0
      %v638 = vmax.f32 %v622, 0.0
      %v639 = vmax.f32 %v623, 0.0
      %v640 = vmax.f32 %v624, 0.0
      %v641 = vmax.f32 %v625, 0.0
      %v642 = vmax.f32 %v626, 0.0
      %v643 = vmax.f32 %v627, 0.0
      %v644 = vmax.f32 %v628, 0.0
      %645 = vst [vmem:[%s226] sm:$0xff] %v629
      %646 = vst [vmem:[%s226 + $0x8] sm:$0xff] %v630
      %647 = vst [vmem:[%s226 + $0x10] sm:$0xff] %v631
      %648 = vst [vmem:[%s226 + $0x18] sm:$0xff] %v632
      %649 = vst [vmem:[%s226 + $0x20] sm:$0xff] %v633
      %650 = vst [vmem:[%s226 + $0x28] sm:$0xff] %v634
      %651 = vst [vmem:[%s226 + $0x30] sm:$0xff] %v635
      %652 = vst [vmem:[%s226 + $0x38] sm:$0xff] %v636
      %653 = vst [vmem:[%s226 + $0x40] sm:$0xff] %v637
      %654 = vst [vmem:[%s226 + $0x48] sm:$0xff] %v638
      %655 = vst [vmem:[%s226 + $0x50] sm:$0xff] %v639
      %656 = vst [vmem:[%s226 + $0x58] sm:$0xff] %v640
      %657 = vst [vmem:[%s226 + $0x60] sm:$0xff] %v641
      %658 = vst [vmem:[%s226 + $0x68] sm:$0xff] %v642
      %659 = vst [vmem:[%s226 + $0x70] sm:$0xff] %v643
      %660 = vst [vmem:[%s226 + $0x78] sm:$0xff] %v644
      %s661 = smul.u32 16, %s16
      %p662 = scmp.lt.s32.totalorder %s661, 31
      %s663 = scalar_select %p662, %s661, 31
      %s664 = smul.addr %s663, 8
      %s665 = scalar_lea.vmem %s5, %s664
      // Predicated region
      $region41: #{residual_block.1} parent=39 // pred_check
        %p666 = pneg %p144
      $region42: #{residual_block.1} parent=39 // pred_check_branch
        %668 = sbr.rel (%p666) target = $region44
      $region43: #{residual_block.1} parent=39 // pred_region
        %s669 = smul.u32 16, %s16
      $region44: #{residual_block.1} parent=39 // pred_fallthru
        _
    $region40: #{residual_block.1} parent=5 // pred_fallthru
      _
    %p670 = scmp.le.s32.totalorder 2, %s11
    // Predicated region
    $region45: #{residual_block.1} parent=5 // pred_check
      %p671 = pneg %p670
    $region46: #{residual_block.1} parent=5 // pred_check_branch
      %673 = sbr.rel (%p671) target = $region48
    $region47: #{residual_block.1} parent=5 // pred_region
      %s674 = ssub.s32 %s11, 2
      // Predicated region
      $region49: #{residual_block.1} parent=47 // pred_check
        %p675 = pneg %p150
      $region50: #{residual_block.1} parent=47 // pred_check_branch
        %677 = sbr.rel (%p675) target = $region52
      $region51: #{residual_block.1} parent=47 // pred_region
        %s678 = smul.u32 16, %s17
        %p679 = scmp.lt.s32.totalorder %s678, 31
        %s680 = scalar_select %p679, %s678, 31
        %s681 = smul.addr %s680, 8
        %s682 = scalar_lea.vmem %s5, %s681
      $region52: #{residual_block.1} parent=47 // pred_fallthru
        _
    $region48: #{residual_block.1} parent=5 // pred_fallthru
      _
  $region6: #{residual_block.1} parent=0 // loop_footer
    %s15 = sadd.s32 1, %s11
  $region7: #{residual_block.1} parent=0 // loop_footer_branch
    %10 = sbr.rel target = $region3
  $region8: #{residual_block.1} parent=0 // loop_exit
    _

</llo_original>
